<compile_context>
chip_gen: v6e
topology: v6e:2x2x1
jax: 0.10.0
libtpu: 0.0.40
codegen_flags: <defaults>
</compile_context>

<pallas_src>
import jax
import jax.numpy as jnp
from jax.experimental import pallas as pl
from jax.experimental.pallas import tpu as pltpu


def _sublane_multiple(dtype) -> int:
    # f32 -> 8, bf16 -> 16, int8/fp8 -> 32 (sub-32-bit dtypes pack sublanes).
    itemsize = jnp.dtype(dtype).itemsize
    packing = max(1, 4 // itemsize)
    return 8 * packing


def _chunk_rows(n_rows: int, align: int, max_chunks: int):
    """Split [0, n_rows) into <= max_chunks contiguous row ranges.

    Chunk starts are multiples of `align` (the HBM second-minor tiling for the
    dtype) so every DMA begins on a layout-tile boundary; the last chunk
    absorbs any unaligned remainder.  All values are static Python ints.
    """
    if n_rows <= align or max_chunks <= 1:
        return [(0, n_rows)]
    n_tiles = n_rows // align
    n_chunks = max(1, min(max_chunks, n_tiles))
    tiles_per_chunk = n_tiles // n_chunks
    chunks = []
    start = 0
    for c in range(n_chunks):
        rows = tiles_per_chunk * align
        if c == n_chunks - 1:
            rows = n_rows - start  # remainder (incl. unaligned tail)
        chunks.append((start, rows))
        start += rows
    return chunks


def _make_hbm_copy_kernel(chunks):
    """Chunked HBM->HBM copy: no VMEM staging, no vld/vst, DMA-engine only."""

    def kernel(x_hbm, o_hbm, sem):
        # Issue every chunk DMA first (several DMA engines stream
        # concurrently), then wait on all of them.
        for idx, (start, size) in enumerate(chunks):
            pltpu.make_async_copy(
                x_hbm.at[pl.ds(start, size)],
                o_hbm.at[pl.ds(start, size)],
                sem.at[idx],
            ).start()
        for idx, (start, size) in enumerate(chunks):
            pltpu.make_async_copy(
                x_hbm.at[pl.ds(start, size)],
                o_hbm.at[pl.ds(start, size)],
                sem.at[idx],
            ).wait()

    return kernel


def flatten_layer(x: jax.Array, *, use_pallas: bool = True,
                  max_chunks: int = 8) -> jax.Array:
    """Equivalent of PyTorch FlattenLayer.forward: x.view(x.shape[0], -1)."""
    b = x.shape[0]
    f = 1
    for d in x.shape[1:]:
        f *= d

    # Fast path: flatten is a zero-cost metadata reshape in XLA.  Any kernel,
    # however well tuned, pays a full read+write of the tensor, so callers
    # that do not strictly require a kernel should use this.
    if not use_pallas:
        return x.reshape(b, f)

    total = b * f
    dtype = x.dtype
    itemsize = jnp.dtype(dtype).itemsize
    sub_mult = _sublane_multiple(dtype)

    # View the tensor as a lane-dense 2-D slab (r, slab_l).  Row-major
    # reshapes preserve element order, so copying the slab and reshaping back
    # to (b, f) is exactly torch's contiguous .view flatten.
    slab_l = None
    for cand in (512, 256, 128):
        if total % cand == 0:
            slab_l = cand
            break
    if slab_l is None:
        # total not a multiple of 128: copy the (b, f) view directly.  With
        # pure HBM->HBM DMA there is no VMEM block, so block bytes can never
        # blow up with large b (fixes the old fallback's unbounded blocks).
        slab_l = f
    r = total // slab_l
    x_slab = x.reshape(r, slab_l)  # zero-cost metadata reshape

    chunks = _chunk_rows(r, sub_mult, max_chunks)
    kernel = _make_hbm_copy_kernel(chunks)

    out = pl.pallas_call(
        kernel,
        out_shape=jax.ShapeDtypeStruct((r, slab_l), dtype),
        in_specs=[pl.BlockSpec(memory_space=pl.ANY)],
        out_specs=pl.BlockSpec(memory_space=pl.ANY),
        scratch_shapes=[pltpu.SemaphoreType.DMA((len(chunks),))],
        # Advisory hint: pure memory traffic (read + write of the tensor).
        cost_estimate=pl.CostEstimate(
            flops=0, transcendentals=0, bytes_accessed=2 * total * itemsize),
    )(x_slab)
    # TODO(synk): input_output_aliases={0: 0} would remove the second HBM
    # buffer entirely, but changes donation semantics for the caller; left off.
    return out.reshape(b, f)


if __name__ == "__main__":
    key = jax.random.PRNGKey(0)

    # Primary case: small NCHW conv-net feature map (B, C, H, W).
    x = jax.random.normal(key, (2, 4, 16, 16), dtype=jnp.float32)
    y = flatten_layer(x)
    jax.block_until_ready(y)
    y_ref = x.reshape(x.shape[0], -1)
    assert y.shape == (2, 4 * 16 * 16), y.shape
    assert y.dtype == x.dtype
    assert jnp.array_equal(y, y_ref), "flatten kernel mismatch (slab path)"

    # Multi-chunk path: larger slab -> several concurrent DMAs.
    k1, k2 = jax.random.split(key)
    x2 = jax.random.normal(k1, (16, 8, 16, 16), dtype=jnp.float32)
    y2 = flatten_layer(x2)
    jax.block_until_ready(y2)
    assert jnp.array_equal(y2, x2.reshape(16, -1)), "flatten mismatch (multi-chunk)"

    # Non-multiple-of-128 total: direct (b, f) HBM->HBM copy.
    x3 = jax.random.normal(k2, (3, 5, 7), dtype=jnp.float32)
    y3 = flatten_layer(x3)
    jax.block_until_ready(y3)
    assert jnp.array_equal(y3, x3.reshape(3, -1)), "flatten mismatch (odd total)"

    print("KERNEL_OK")
</pallas_src>

<mosaic_0001>
module attributes {stable_mosaic.version = 11 : i64} {
  func.func @kernel(%arg0: memref<4x512xf32, #tpu.memory_space<any>>, %arg1: memref<4x512xf32, #tpu.memory_space<any>>, %arg2: memref<1x!tpu.dma_semaphore, #tpu.memory_space<semaphore_mem>>) attributes {dimension_semantics = [], scalar_prefetch = 0 : i64, scratch_operands = 1 : i64, tpu.core_type = #tpu.core_type<tc>} {
    %c0_i32 = arith.constant 0 : i32
    %c0_i32_0 = arith.constant 0 : i32
    %c0_i32_1 = arith.constant 0 : i32
    %0 = tpu.memref_slice %arg0[%c0_i32_0, %c0_i32_1] : memref<4x512xf32, #tpu.memory_space<any>> -> memref<4x512xf32, #tpu.memory_space<any>>
    %c0_i32_2 = arith.constant 0 : i32
    %c0_i32_3 = arith.constant 0 : i32
    %1 = tpu.memref_slice %arg1[%c0_i32_2, %c0_i32_3] : memref<4x512xf32, #tpu.memory_space<any>> -> memref<4x512xf32, #tpu.memory_space<any>>
    %2 = tpu.memref_slice %arg2[%c0_i32] : memref<1x!tpu.dma_semaphore, #tpu.memory_space<semaphore_mem>> -> memref<1x!tpu.dma_semaphore, #tpu.memory_space<semaphore_mem>>
    %3 = tpu.memref_squeeze %2 : memref<1x!tpu.dma_semaphore, #tpu.memory_space<semaphore_mem>> -> memref<!tpu.dma_semaphore, #tpu.memory_space<semaphore_mem>>
    tpu.enqueue_dma source(%0 : memref<4x512xf32, #tpu.memory_space<any>>) target(%1 : memref<4x512xf32, #tpu.memory_space<any>>) target_semaphore(%3 : memref<!tpu.dma_semaphore, #tpu.memory_space<semaphore_mem>>)
    %c0_i32_4 = arith.constant 0 : i32
    %c0_i32_5 = arith.constant 0 : i32
    %c0_i32_6 = arith.constant 0 : i32
    %4 = tpu.memref_slice %arg0[%c0_i32_5, %c0_i32_6] : memref<4x512xf32, #tpu.memory_space<any>> -> memref<4x512xf32, #tpu.memory_space<any>>
    %c0_i32_7 = arith.constant 0 : i32
    %c0_i32_8 = arith.constant 0 : i32
    %5 = tpu.memref_slice %arg1[%c0_i32_7, %c0_i32_8] : memref<4x512xf32, #tpu.memory_space<any>> -> memref<4x512xf32, #tpu.memory_space<any>>
    %6 = tpu.memref_slice %arg2[%c0_i32_4] : memref<1x!tpu.dma_semaphore, #tpu.memory_space<semaphore_mem>> -> memref<1x!tpu.dma_semaphore, #tpu.memory_space<semaphore_mem>>
    %7 = tpu.memref_squeeze %6 : memref<1x!tpu.dma_semaphore, #tpu.memory_space<semaphore_mem>> -> memref<!tpu.dma_semaphore, #tpu.memory_space<semaphore_mem>>
    tpu.wait_dma2 semaphore(%7 : memref<!tpu.dma_semaphore, #tpu.memory_space<semaphore_mem>>) src(%4 : memref<4x512xf32, #tpu.memory_space<any>>) dst(%5 : memref<4x512xf32, #tpu.memory_space<any>>)
    return
  }
}

</mosaic_0001>

<llo_original>
// kernel: tpu_custom_call.1
$region0: #{tpu_custom_call.1}
  #allocation0 [shape = 'u32[]', space=smem, size = 0x4, offset = 0x4, fixed_abs, tag = 'smem constant byte address 0x4 - core index']
  #allocation1 [shape = 'u32[144,128]{1,0:T(1,128)}', space=vmem, size = 0x12000, scoped, tag = 'internal scratch']
  #allocation2 [shape = 's32[1]{0}', space=sflag, size = 0x4, scoped, tag = 'scratch operand']
  #allocation3 [shape = 's32[]', space=sflag, size = 0x4, offset = 0, fixed_abs, tag = 'sflag constant byte address 0x0 - dummy sync flag']
  #allocation4 [shape = 'u32[0]{0}', space=smem, size = 0, offset = 0, fixed_abs, tag = 'smem constant byte address 0x0 - null']
  %s0 = inlined_call_operand.hbm [shape: f32[4,512], index: 0, kind: input, shape index: {}]
  %s1 = inlined_call_operand.hbm [shape: f32[4,512], index: 1, kind: output, shape index: {}]
  %s2 = sld [smem:[#allocation0]]
  $region2: #{tpu_custom_call.1} parent=0
    _
  %s4 = ssub.s32 1, %s2
  %s5 = scalar_select 0, %s4, %s2
  %s7 = sshll.u32 1, 14
  %s8 = sxor.u32 4294967295, %s7
  %12 = dma.general %s0, 256, %s1, [#allocation2], 131072, [#allocation4], 0, 0
  %s13 = smul.u32 4, 1
  %s14 = smul.u32 %s13, 4
  %s15 = sshll.u32 %s14, 4
  %16 = dma.done [#allocation2], %s15
  %17 = vsyncmov [#allocation2]
  %s18 = vpop.sfrf %17
  %p19 = scmp.eq.s32.totalorder %s18, 0
  %p20 = pneg %p19
  %22 = shalt.err (%p20)

</llo_original>
